<compile_context>
chip_gen: v6e
topology: v6e:2x2x1
jax: 0.10.0
libtpu: 0.0.40
codegen_flags: <defaults>
</compile_context>

<pallas_src>
import functools

import jax
import jax.numpy as jnp
from jax.experimental import pallas as pl
from jax.experimental.pallas import tpu as pltpu


def _round_up(n, m):
    return ((n + m - 1) // m) * m


def _rsoftmax_kernel(x_ref, o_ref, *, radix):
    # x_ref: (TB, card, radix, rest)  -- native input memory order
    # o_ref: (TB, radix, card, rest)  -- PyTorch transpose(1, 2) order
    # Softmax over the radix axis, unrolled: everything is elementwise on
    # (TB, card, rest) slabs, so no in-kernel transpose / sublane reduction.
    xs = [x_ref[:, :, r, :].astype(jnp.float32) for r in range(radix)]
    m = xs[0]
    for r in range(1, radix):
        m = jnp.maximum(m, xs[r])
    es = [jnp.exp(v - m) for v in xs]
    s = es[0]
    for r in range(1, radix):
        s = s + es[r]
    inv = pl.reciprocal(s, approx=True)  # EUP slot, essentially free
    for r in range(radix):
        o_ref[:, r, :, :] = (es[r] * inv).astype(o_ref.dtype)


def _sigmoid_kernel(x_ref, o_ref):
    # x_ref / o_ref: (TB, 1, total)
    x = x_ref[...].astype(jnp.float32)
    o_ref[...] = pl.reciprocal(1.0 + jnp.exp(-x), approx=True).astype(o_ref.dtype)


def _batch_tile(b, row_bytes, budget_bytes=4 << 20):
    """Batch rows per grid step: big blocks (less per-step overhead, bigger
    DMAs) but bounded so (in+out) x double-buffering stays well under the
    smallest default scoped VMEM (16 MiB on v5e, 32 MiB on v6e/v7x)."""
    cap = max(1, min(b, budget_bytes // max(row_bytes, 1)))
    if cap >= b and b > 1:
        # keep >= 2 grid steps so v7x megacore can shard the batch axis
        cap = (b + 1) // 2
    # largest divisor of b not exceeding cap -> no partial (padded) blocks
    tb = 1
    for d in range(1, cap + 1):
        if b % d == 0:
            tb = d
    return tb


def rsoftmax(x, radix, cardinality):
    """Pallas implementation of rSoftMax.forward.

    x: (B, C, H, W) array (NCHW, like the PyTorch module input).
    radix > 1  -> returns (B, C*H*W), softmax over the radix axis in the
                  (B, radix, cardinality, rest) view, flattened like PyTorch.
    radix == 1 -> returns sigmoid(x) with the input shape (like PyTorch).
    """
    b = x.shape[0]
    total = x.size // b
    itemsize = jnp.dtype(x.dtype).itemsize

    if radix > 1:
        rest = total // (cardinality * radix)
        # Free reshape (same memory order as the NCHW input) -- no transpose.
        x4 = x.reshape(b, cardinality, radix, rest)

        # Padded VMEM bytes for one batch row of (input tile + output tile).
        lane_pad = _round_up(rest, 128)
        in_row = cardinality * _round_up(radix, 8) * lane_pad * itemsize
        out_row = radix * _round_up(cardinality, 8) * lane_pad * itemsize
        tb = _batch_tile(b, in_row + out_row)
        grid = (pl.cdiv(b, tb),)
        # NOTE: if a single batch row ever exceeds VMEM (huge H*W), the `rest`
        # (lane) axis would additionally need tiling in multiples of 128.

        out = pl.pallas_call(
            functools.partial(_rsoftmax_kernel, radix=radix),
            out_shape=jax.ShapeDtypeStruct(
                (b, radix, cardinality, rest), x.dtype
            ),
            grid_spec=pltpu.PrefetchScalarGridSpec(
                num_scalar_prefetch=0,
                grid=grid,
                in_specs=[
                    pl.BlockSpec(
                        (tb, cardinality, radix, rest),
                        lambda i: (i, 0, 0, 0),
                    )
                ],
                out_specs=pl.BlockSpec(
                    (tb, radix, cardinality, rest),
                    lambda i: (i, 0, 0, 0),
                ),
            ),
            compiler_params=pltpu.CompilerParams(
                dimension_semantics=("parallel",)
            ),
        )(x4)
        # Contiguous flatten -> matches PyTorch's x.reshape(batch, -1).
        return out.reshape(b, -1)
    else:
        xf = x.reshape(b, 1, total)  # free reshape; lane axis = all channels
        lane_pad = _round_up(total, 128)
        row_bytes = 2 * lane_pad * itemsize
        tb = _batch_tile(b, row_bytes)
        grid = (pl.cdiv(b, tb),)

        out = pl.pallas_call(
            _sigmoid_kernel,
            out_shape=jax.ShapeDtypeStruct((b, 1, total), x.dtype),
            grid_spec=pltpu.PrefetchScalarGridSpec(
                num_scalar_prefetch=0,
                grid=grid,
                in_specs=[pl.BlockSpec((tb, 1, total), lambda i: (i, 0, 0))],
                out_specs=pl.BlockSpec((tb, 1, total), lambda i: (i, 0, 0)),
            ),
            compiler_params=pltpu.CompilerParams(
                dimension_semantics=("parallel",)
            ),
        )(xf)
        # PyTorch's radix==1 branch keeps the input shape.
        return out.reshape(x.shape)


def _reference_rsoftmax(x, radix, cardinality):
    b = x.shape[0]
    if radix > 1:
        xr = x.reshape(b, cardinality, radix, -1).transpose(0, 2, 1, 3)
        xr = jax.nn.softmax(xr, axis=1)
        return xr.reshape(b, -1)
    else:
        return jax.nn.sigmoid(x)


if __name__ == "__main__":
    key = jax.random.PRNGKey(0)
    k1, k2, k3 = jax.random.split(key, 3)

    # Case 1: radix=2, cardinality=2, 8 channels per (card,radix) group, 4x4
    # spatial  ->  C = 32, rest = 8*16 = 128 (lane-dense path).
    batch, cardinality, radix, cpg, hw = 2, 2, 2, 8, 4
    channels = cardinality * radix * cpg  # 32
    x = jax.random.normal(k1, (batch, channels, hw, hw), dtype=jnp.float32)
    y = jax.block_until_ready(rsoftmax(x, radix=radix, cardinality=cardinality))
    y_ref = _reference_rsoftmax(x, radix, cardinality)
    assert y.shape == (batch, channels * hw * hw)
    assert jnp.allclose(y, y_ref, atol=2e-3, rtol=2e-3)

    # Case 2: tiny/padded shapes: cardinality=4, radix=2, 4 ch/group, H=W=1.
    card2, radix2, cpg2 = 4, 2, 4
    channels2 = card2 * radix2 * cpg2  # 32
    x2 = jax.random.normal(k2, (batch, channels2, 1, 1), dtype=jnp.float32)
    y2 = jax.block_until_ready(rsoftmax(x2, radix=radix2, cardinality=card2))
    y2_ref = _reference_rsoftmax(x2, radix2, card2)
    assert y2.shape == (batch, channels2)
    assert jnp.allclose(y2, y2_ref, atol=2e-3, rtol=2e-3)

    # Case 3: radix == 1 sigmoid path (keeps input shape, like PyTorch).
    x3 = jax.random.normal(k3, (batch, 16, 4, 4), dtype=jnp.float32)
    y3 = jax.block_until_ready(rsoftmax(x3, radix=1, cardinality=card2))
    y3_ref = _reference_rsoftmax(x3, 1, card2)
    assert y3.shape == x3.shape
    assert jnp.allclose(y3, y3_ref, atol=2e-3, rtol=2e-3)

    print("KERNEL_OK")
</pallas_src>

<mosaic_0001>
module attributes {stable_mosaic.version = 11 : i64} {
  func.func @_rsoftmax_kernel(%arg0: i32, %arg1: memref<1x2x2x128xf32, #tpu.memory_space<vmem>>, %arg2: memref<1x2x2x128xf32, #tpu.memory_space<vmem>>) attributes {dimension_semantics = [#tpu.dimension_semantics<parallel>], iteration_bounds = array<i64: 2>, scalar_prefetch = 0 : i64, scratch_operands = 0 : i64, tpu.core_type = #tpu.core_type<tc>, window_params = [{transform_indices = @transform_0, window_bounds = array<i64: 1, 2, 2, 128>}, {transform_indices = @transform_1, window_bounds = array<i64: 1, 2, 2, 128>}]} {
    %c0 = arith.constant 0 : index
    %c0_0 = arith.constant 0 : index
    %c0_1 = arith.constant 0 : index
    %c0_2 = arith.constant 0 : index
    %0 = vector.load %arg1[%c0, %c0_0, %c0_1, %c0_2] : memref<1x2x2x128xf32, #tpu.memory_space<vmem>>, vector<1x2x1x128xf32>
    %1 = vector.shape_cast %0 : vector<1x2x1x128xf32> to vector<1x2x128xf32>
    %c0_3 = arith.constant 0 : index
    %c0_4 = arith.constant 0 : index
    %c1 = arith.constant 1 : index
    %c0_5 = arith.constant 0 : index
    %2 = vector.load %arg1[%c0_3, %c0_4, %c1, %c0_5] : memref<1x2x2x128xf32, #tpu.memory_space<vmem>>, vector<1x2x1x128xf32>
    %3 = vector.shape_cast %2 : vector<1x2x1x128xf32> to vector<1x2x128xf32>
    %4 = arith.maximumf %1, %3 : vector<1x2x128xf32>
    %5 = arith.subf %1, %4 : vector<1x2x128xf32>
    %6 = math.exp %5 : vector<1x2x128xf32>
    %7 = arith.subf %3, %4 : vector<1x2x128xf32>
    %8 = math.exp %7 : vector<1x2x128xf32>
    %9 = arith.addf %6, %8 : vector<1x2x128xf32>
    %10 = tpu.reciprocal %9 {approx = true} : vector<1x2x128xf32> -> vector<1x2x128xf32>
    %11 = arith.mulf %6, %10 : vector<1x2x128xf32>
    %c0_6 = arith.constant 0 : index
    %c0_7 = arith.constant 0 : index
    %c0_8 = arith.constant 0 : index
    %c0_9 = arith.constant 0 : index
    %12 = vector.load %arg2[%c0_6, %c0_7, %c0_8, %c0_9] : memref<1x2x2x128xf32, #tpu.memory_space<vmem>>, vector<1x1x2x128xf32>
    %13 = vector.shape_cast %12 : vector<1x1x2x128xf32> to vector<1x2x128xf32>
    %14 = vector.shape_cast %11 : vector<1x2x128xf32> to vector<1x1x2x128xf32>
    tpu.vector_store %arg2[%c0_6, %c0_7, %c0_8, %c0_9], %14 {strides = array<i32>} : memref<1x2x2x128xf32, #tpu.memory_space<vmem>>, vector<1x1x2x128xf32>,
    %15 = arith.mulf %8, %10 : vector<1x2x128xf32>
    %c0_10 = arith.constant 0 : index
    %c1_11 = arith.constant 1 : index
    %c0_12 = arith.constant 0 : index
    %c0_13 = arith.constant 0 : index
    %16 = vector.load %arg2[%c0_10, %c1_11, %c0_12, %c0_13] : memref<1x2x2x128xf32, #tpu.memory_space<vmem>>, vector<1x1x2x128xf32>
    %17 = vector.shape_cast %16 : vector<1x1x2x128xf32> to vector<1x2x128xf32>
    %18 = vector.shape_cast %15 : vector<1x2x128xf32> to vector<1x1x2x128xf32>
    tpu.vector_store %arg2[%c0_10, %c1_11, %c0_12, %c0_13], %18 {strides = array<i32>} : memref<1x2x2x128xf32, #tpu.memory_space<vmem>>, vector<1x1x2x128xf32>,
    return
  }
  func.func @transform_0(%arg0: i32) -> (i32, i32, i32, i32) {
    %c0_i32 = arith.constant 0 : i32
    %c0_i32_0 = arith.constant 0 : i32
    %c0_i32_1 = arith.constant 0 : i32
    %c0_i32_2 = arith.constant 0 : i32
    return %arg0, %c0_i32, %c0_i32_0, %c0_i32_1 : i32, i32, i32, i32
  }
  func.func @transform_1(%arg0: i32) -> (i32, i32, i32, i32) {
    %c0_i32 = arith.constant 0 : i32
    %c0_i32_0 = arith.constant 0 : i32
    %c0_i32_1 = arith.constant 0 : i32
    %c0_i32_2 = arith.constant 0 : i32
    return %arg0, %c0_i32, %c0_i32_0, %c0_i32_1 : i32, i32, i32, i32
  }
}

</mosaic_0001>

<llo_original>
// kernel: tpu_custom_call.1
$region0: #{tpu_custom_call.1}
  #allocation0 [shape = 'u32[]', space=smem, size = 0x4, offset = 0x4, fixed_abs, tag = 'smem constant byte address 0x4 - core index']
  #allocation1 [shape = 'u32[144,128]{1,0:T(1,128)}', space=vmem, size = 0x12000, scoped, tag = 'internal scratch']
  %s0 = inlined_call_operand.hbm [shape: f32[2,2,2,128], index: 0, kind: input, shape index: {}]
  %s1 = inlined_call_operand.hbm [shape: f32[2,2,2,128], index: 1, kind: output, shape index: {}]
  %s2 = sld [smem:[#allocation0]]
  $region41: #{tpu_custom_call.1} parent=0
    _
  %s4 = ssub.s32 1, %s2
  %s5 = scalar_select 0, %s4, %s2
  $region1: #{tpu_custom_call.1} parent=0
    #allocation2 [shape = 'u8[4096]{0}', space=vmem, size = 0x1000, scoped, tag = 'input window, operand 0']
    #allocation3 [shape = 's32[2]{0}', space=sflag, size = 0x8, scoped, tag = 'scoped memory for tpu_custom_call.1']
    #allocation4 [shape = 's32[2]{0}', space=sflag, size = 0x8, scoped, tag = 'scoped memory for tpu_custom_call.1']
    #allocation5 [shape = 'u8[4096]{0}', space=vmem, size = 0x1000, scoped, tag = 'output window, operand 0']
    %6 = vsyncpa [#allocation3], 0
    %s7 = scalar_lea.sflag [#allocation3], 1
    %8 = vsyncpa %s7, 0
    %9 = vsyncpa [#allocation4], 0
    %s10 = scalar_lea.sflag [#allocation4], 1
    %11 = vsyncpa %s10, 0
    loop: start=0, step=1, limit=4
    $region2: #{tpu_custom_call.1} parent=1 // loop_pre_header
      _
    $region3: #{tpu_custom_call.1} parent=1 // loop_header
      %s13 = sphi 0, %s17
      %p14 = scmp.ge.s32.totalorder %s13, 4
      %s23 = sphi 0, %s25
      %s26 = sphi 0, %s23
      %s27 = sphi 0, %s26
      %s43 = sphi 0, %s27
      %s49 = sphi 0, %s51
      %s52 = sphi 0, %s49
      %s53 = sphi 0, %s52
      %s69 = sphi 0, %s53
    $region4: #{tpu_custom_call.1} parent=1 // loop_header_branch
      %16 = sbr.rel (%p14) target = $region8
    $region5: #{tpu_custom_call.1} parent=1 // loop_body
      %s18 = ssub.s32 %s13, 1
      %s19 = ssub.s32 %s13, 2
      %s20 = sadd.s32 %s13, 1
      %s21 = ssub.s32 %s13, %s20
      %p22 = scmp.eq.s32.totalorder %s21, 0
      %s24 = sadd.s32 %s23, 1
      %s25 = scalar_select %p22, %s23, %s24
      %p28 = pneg %p22
      %p29 = scmp.eq.s32.totalorder %s13, 1
      %p30 = por %p28, %p29
      %p31 = scmp.ne.s32.totalorder %s23, %s26
      %p32 = scmp.eq.s32.totalorder %s13, 0
      %p33 = por %p31, %p32
      %p34 = scmp.ne.s32.totalorder %s23, %s26
      %p35 = scmp.eq.s32.totalorder %s18, 1
      %p36 = por %p34, %p35
      %p37 = scmp.ne.s32.totalorder %s26, %s27
      %p38 = scmp.eq.s32.totalorder %s18, 0
      %p39 = por %p37, %p38
      %p40 = scmp.ne.s32.totalorder %s26, %s27
      %p41 = scmp.eq.s32.totalorder %s19, 1
      %p42 = por %p40, %p41
      %p44 = scmp.ne.s32.totalorder %s27, %s43
      %p45 = scmp.eq.s32.totalorder %s19, 0
      %p46 = por %p44, %p45
      %s47 = ssub.s32 %s13, %s20
      %p48 = scmp.eq.s32.totalorder %s47, 0
      %s50 = sadd.s32 %s49, 1
      %s51 = scalar_select %p48, %s49, %s50
      %p54 = pneg %p48
      %p55 = scmp.eq.s32.totalorder %s13, 1
      %p56 = por %p54, %p55
      %p57 = scmp.ne.s32.totalorder %s49, %s52
      %p58 = scmp.eq.s32.totalorder %s13, 0
      %p59 = por %p57, %p58
      %p60 = scmp.ne.s32.totalorder %s49, %s52
      %p61 = scmp.eq.s32.totalorder %s18, 1
      %p62 = por %p60, %p61
      %p63 = scmp.ne.s32.totalorder %s52, %s53
      %p64 = scmp.eq.s32.totalorder %s18, 0
      %p65 = por %p63, %p64
      %p66 = scmp.ne.s32.totalorder %s52, %s53
      %p67 = scmp.eq.s32.totalorder %s19, 1
      %p68 = por %p66, %p67
      %p70 = scmp.ne.s32.totalorder %s53, %s69
      %p71 = scmp.eq.s32.totalorder %s19, 0
      %p72 = por %p70, %p71
      %p73 = scmp.le.s32.totalorder 1, %s13
      %p74 = scmp.lt.s32.totalorder %s13, 3
      %p75 = pnand %p73, %p74
      %p76 = pneg %p75
      // Predicated region
      $region9: #{tpu_custom_call.1} parent=5 // pred_check
        _
      $region10: #{tpu_custom_call.1} parent=5 // pred_check_branch
        %78 = sbr.rel (%p75) target = $region12
      $region11: #{tpu_custom_call.1} parent=5 // pred_region
        %s79 = ssub.s32 %s13, 1
      $region12: #{tpu_custom_call.1} parent=5 // pred_fallthru
        _
      %p80 = scmp.lt.s32.totalorder %s13, 2
      // Predicated region
      $region13: #{tpu_custom_call.1} parent=5 // pred_check
        %p81 = pneg %p80
      $region14: #{tpu_custom_call.1} parent=5 // pred_check_branch
        %83 = sbr.rel (%p81) target = $region16
      $region15: #{tpu_custom_call.1} parent=5 // pred_region
        // Predicated region
        $region17: #{tpu_custom_call.1} parent=15 // pred_check
          %p84 = pneg %p33
        $region18: #{tpu_custom_call.1} parent=15 // pred_check_branch
          %86 = sbr.rel (%p84) target = $region20
        $region19: #{tpu_custom_call.1} parent=15 // pred_region
          %s87 = sand.u32 %s23, 1
          %s88 = scalar_lea.sflag [#allocation3], %s87
          %s89 = sand.u32 %s23, 1
          %s90 = smul.addr %s89, 4
          %s91 = scalar_lea.vmem [#allocation2], %s90
          %s93 = ssub.s32 64, 64
          %94 = vsyncadd %s88, %s93
          %s95 = smul.addr %s13, 2
          %s96 = smul.addr %s95, 32
          %s97 = scalar_lea.hbm %s0, %s96
          %s98 = sshll.u32 %s91, 4
          %s99 = int_to_ptr.vmem [resolvable:$true] %s98
          %104 = dma.hbm_to_vmem [thread:$0]  %s97, 64, %s99, %s88, 32, 32, 2
        $region20: #{tpu_custom_call.1} parent=15 // pred_fallthru
          _
      $region16: #{tpu_custom_call.1} parent=5 // pred_fallthru
        _
      %p105 = scmp.le.s32.totalorder 1, %s13
      %p106 = scmp.lt.s32.totalorder %s13, 3
      %p107 = pnand %p105, %p106
      %p108 = pneg %p107
      // Predicated region
      $region21: #{tpu_custom_call.1} parent=5 // pred_check
        _
      $region22: #{tpu_custom_call.1} parent=5 // pred_check_branch
        %110 = sbr.rel (%p107) target = $region24
      $region23: #{tpu_custom_call.1} parent=5 // pred_region
        %s111 = ssub.s32 %s13, 1
        %s112 = sand.u32 %s26, 1
        %s113 = scalar_lea.sflag [#allocation3], %s112
        %s114 = sand.u32 %s26, 1
        %s115 = smul.addr %s114, 4
        %s116 = scalar_lea.vmem [#allocation2], %s115
        // Predicated region
        $region25: #{tpu_custom_call.1} parent=23 // pred_check
          %p117 = pneg %p39
        $region26: #{tpu_custom_call.1} parent=23 // pred_check_branch
          %119 = sbr.rel (%p117) target = $region28
        $region27: #{tpu_custom_call.1} parent=23 // pred_region
          %120 = dma.done %s113, 64
        $region28: #{tpu_custom_call.1} parent=23 // pred_fallthru
          _
        %s121 = sand.u32 %s26, 1
        %s122 = scalar_lea.sflag [#allocation3], %s121
        %s123 = sand.u32 %s26, 1
        %s124 = smul.addr %s123, 4
        %s125 = scalar_lea.vmem [#allocation2], %s124
        %p126 = pneg %p39
        %p127 = pneg %p36
        %p128 = pneg %p65
        %p129 = pneg %p62
        %s130 = sand.u32 %s52, 1
        %s131 = scalar_lea.sflag [#allocation4], %s130
        %s132 = sand.u32 %s52, 1
        %s133 = smul.addr %s132, 4
        %s134 = scalar_lea.vmem [#allocation5], %s133
        %v135 = vld [vmem:[%s116] sm:$0x1]
        %v136 = vld [vmem:[%s116 + $0x2] sm:$0x1]
        %v137 = vld [vmem:[%s116 + $0x1] sm:$0x1]
        %v138 = vld [vmem:[%s116 + $0x3] sm:$0x1]
        %v139 = vmax.f32 %v135, %v137
        %v140 = vmax.f32 %v136, %v138
        %v141 = vsub.f32 %v135, %v139
        %v142 = vsub.f32 %v136, %v140
        %v143 = vmul.f32 %v141, 1.442695
        %v144 = vpow.pop %v143
        %v145 = vmul.f32 %v142, 1.442695
        %v146 = vpow.pop %v145
        %v147 = vsub.f32 %v137, %v139
        %v148 = vsub.f32 %v138, %v140
        %v149 = vmul.f32 %v147, 1.442695
        %v150 = vpow.pop %v149
        %v151 = vmul.f32 %v148, 1.442695
        %v152 = vpow.pop %v151
        %v153 = vadd.f32 %v144, %v150
        %v154 = vadd.f32 %v146, %v152
        %v155 = vrcp.pop %v153
        %v156 = vrcp.pop %v154
        %v157 = vmul.f32 %v144, %v155
        %v158 = vmul.f32 %v146, %v156
        %v161 = vrot.slane %v158, 7
        %vm162 = vcmask 1041409
        %v163 = vsel %vm162, %v161, %v157
        %165 = vst [vmem:[%s134] sm:$0x3] %v163
        %v166 = vmul.f32 %v150, %v155
        %v167 = vmul.f32 %v152, %v156
        %v170 = vrot.slane %v167, 7
        %v171 = vsel %vm162, %v170, %v166
        %s173 = scalar_lea.vmem %s134, 2 [#allocation5]
        %174 = vst [vmem:[%s173] sm:$0x3] %v171
        %s175 = sand.u32 %s52, 1
        %s176 = scalar_lea.sflag [#allocation4], %s175
        %s177 = sand.u32 %s52, 1
        %s178 = smul.addr %s177, 4
        %s179 = scalar_lea.vmem [#allocation5], %s178
        // Predicated region
        $region29: #{tpu_custom_call.1} parent=23 // pred_check
          %p180 = pneg %p62
        $region30: #{tpu_custom_call.1} parent=23 // pred_check_branch
          %182 = sbr.rel (%p180) target = $region32
        $region31: #{tpu_custom_call.1} parent=23 // pred_region
          %s184 = ssub.s32 64, 64
          %185 = vsyncadd %s176, %s184
          %s186 = smul.addr %s18, 2
          %s187 = smul.addr %s186, 32
          %s188 = scalar_lea.hbm %s1, %s187
          %s189 = sshll.u32 %s179, 4
          %s190 = int_to_ptr.vmem [resolvable:$true] %s189
          %195 = dma.vmem_to_hbm [thread:$0]  %s190, 64, %s188, %s176, 32, 32, 2
        $region32: #{tpu_custom_call.1} parent=23 // pred_fallthru
          _
      $region24: #{tpu_custom_call.1} parent=5 // pred_fallthru
        _
      %p196 = scmp.le.s32.totalorder 2, %s13
      // Predicated region
      $region33: #{tpu_custom_call.1} parent=5 // pred_check
        %p197 = pneg %p196
      $region34: #{tpu_custom_call.1} parent=5 // pred_check_branch
        %199 = sbr.rel (%p197) target = $region36
      $region35: #{tpu_custom_call.1} parent=5 // pred_region
        %s200 = ssub.s32 %s13, 2
        // Predicated region
        $region37: #{tpu_custom_call.1} parent=35 // pred_check
          %p201 = pneg %p68
        $region38: #{tpu_custom_call.1} parent=35 // pred_check_branch
          %203 = sbr.rel (%p201) target = $region40
        $region39: #{tpu_custom_call.1} parent=35 // pred_region
          %s204 = sand.u32 %s53, 1
          %s205 = scalar_lea.sflag [#allocation4], %s204
          %s206 = sand.u32 %s53, 1
          %s207 = smul.addr %s206, 4
          %s208 = scalar_lea.vmem [#allocation5], %s207
          %209 = dma.done %s205, 64
        $region40: #{tpu_custom_call.1} parent=35 // pred_fallthru
          _
      $region36: #{tpu_custom_call.1} parent=5 // pred_fallthru
        _
    $region6: #{tpu_custom_call.1} parent=1 // loop_footer
      %s17 = sadd.s32 1, %s13
    $region7: #{tpu_custom_call.1} parent=1 // loop_footer_branch
      %12 = sbr.rel target = $region3
    $region8: #{tpu_custom_call.1} parent=1 // loop_exit
      _
    %210 = vsyncpa [#allocation3], 1
    %s211 = scalar_lea.sflag [#allocation3], 1
    %212 = vsyncpa %s211, 1
    %213 = vsyncpa [#allocation4], 1
    %s214 = scalar_lea.sflag [#allocation4], 1
    %215 = vsyncpa %s214, 1

</llo_original>
